<compile_context>
chip_gen: v5e
topology: v5e:2x2
jax: 0.10.0
libtpu: 0.0.40
codegen_flags: <defaults>
</compile_context>

<pallas_src>
import jax
import jax.numpy as jnp
from jax.experimental import pallas as pl
from jax.experimental.pallas import tpu as pltpu


def _round_up(x, m):
    return (x + m - 1) // m * m


# ----------------------------- Pallas kernels ------------------------------

def _mm_kernel(a_ref, b_ref, o_ref):
    # Single-K-step tile: no accumulator scratch, no init/finalize phases.
    o_ref[...] = jnp.dot(a_ref[...], b_ref[...],
                         preferred_element_type=jnp.float32).astype(o_ref.dtype)


def pallas_matmul(a, b, out_dtype=jnp.bfloat16):
    """out = a @ b.  a: (M, K), b: (K, N) with K, N multiples of 128 (the
    weight matrices are pre-padded once outside the jitted forward).

    K stays as one full block (<= 512 for every layer here), so no scratch
    accumulator / K grid axis is needed.  Tiles are sized for few grid steps
    while keeping >= 2 programs on a parallel axis for the v7x megacore."""
    M, K = a.shape
    K2, N = b.shape
    assert K == K2 and K % 128 == 0 and N % 128 == 0 and K <= 2048

    a = a.astype(jnp.bfloat16)
    b = b.astype(jnp.bfloat16)

    tm = min(_round_up(M, 8), 256)
    Mp = _round_up(M, tm)
    if Mp != M:
        a = jnp.pad(a, ((0, Mp - M), (0, 0)))
    tn = min(N, 2048)
    if (Mp // tm) * (N // tn) < 2 and N % 256 == 0:
        tn = max(128, N // 2)          # keep >= 2 programs (v7x: 2 TCs/chip)

    out = pl.pallas_call(
        _mm_kernel,
        out_shape=jax.ShapeDtypeStruct((Mp, N), out_dtype),
        grid=(Mp // tm, N // tn),
        in_specs=[pl.BlockSpec((tm, K), lambda i, j: (i, 0)),
                  pl.BlockSpec((K, tn), lambda i, j: (0, j))],
        out_specs=pl.BlockSpec((tm, tn), lambda i, j: (i, j)),
        compiler_params=pltpu.CompilerParams(
            dimension_semantics=("parallel", "parallel"),
            vmem_limit_bytes=32 * 1024 * 1024),
    )(a, b)
    return out[:M] if Mp != M else out


def _bn_relu_kernel(x_ref, g_ref, b_ref, o_ref):
    # Training-mode BatchNorm (batch stats, biased variance, eps=1e-5) + ReLU.
    # bf16 in/out, f32 math inside the kernel (no wrapper-side upcast copy).
    x = x_ref[...].astype(jnp.float32)
    mean = jnp.mean(x, axis=0, keepdims=True)
    xc = x - mean
    var = jnp.mean(xc * xc, axis=0, keepdims=True)
    inv = jax.lax.rsqrt(var + 1e-5)
    y = xc * inv * g_ref[...] + b_ref[...]
    o_ref[...] = jnp.maximum(y, 0.0).astype(o_ref.dtype)


def pallas_bn_relu(x2d, gamma, beta):
    """x2d: (R, C) bf16, rows = N*H*W samples, cols = channels.
    gamma/beta: (1, C) f32.  Stats are per-channel, so the channel axis is an
    embarrassingly parallel grid axis (>= 2 blocks for the 512/256-channel
    layers -> both v7x TensorCores busy)."""
    R, C = x2d.shape
    cblk = 128 if C % 128 == 0 else C
    return pl.pallas_call(
        _bn_relu_kernel,
        out_shape=jax.ShapeDtypeStruct((R, C), jnp.bfloat16),
        grid=(C // cblk,),
        in_specs=[pl.BlockSpec((R, cblk), lambda c: (0, c)),
                  pl.BlockSpec((1, cblk), lambda c: (0, c)),
                  pl.BlockSpec((1, cblk), lambda c: (0, c))],
        out_specs=pl.BlockSpec((R, cblk), lambda c: (0, c)),
        compiler_params=pltpu.CompilerParams(
            dimension_semantics=("parallel",)),
    )(x2d.astype(jnp.bfloat16), gamma, beta)


# ------------------------------- model glue --------------------------------

# (cin, cout, stride, padding) — matches the PyTorch Generator exactly.
LAYERS = [
    (100, 8 * 64, 1, 0),
    (8 * 64, 4 * 64, 2, 1),
    (4 * 64, 2 * 64, 2, 1),
    (2 * 64, 64, 2, 1),
    (64, 3, 2, 1),
]


def _prep_wmat(w):
    """(Cin, Cout, 4, 4) PyTorch ConvTranspose2d weight -> bf16 (Cin, 16*Cout)
    matrix with columns ordered (kh, kw, cout), zero-padded so both dims are
    multiples of 128.  Done once, outside the jitted forward."""
    cin, cout = w.shape[0], w.shape[1]
    m = jnp.transpose(w, (0, 2, 3, 1)).reshape(cin, 16 * cout)
    kp = _round_up(cin, 128)
    np_ = _round_up(16 * cout, 128)
    m = jnp.pad(m, ((0, kp - cin), (0, np_ - 16 * cout)))
    return m.astype(jnp.bfloat16)


# Parity gather for ConvTranspose2d(kernel=4, stride=2, padding=1):
# out[n, 2m+py, 2m'+px] = sum over (kh, dy) in _ROW_TAPS[py] and
# (kw, dx) in _ROW_TAPS[px] of contrib[n, m+dy, m'+dx, kh, kw]
# (contributions outside the input are zero).
_ROW_TAPS = {0: ((1, 0), (3, -1)),
             1: ((2, 0), (0, 1))}


def conv_transpose2d_s2(x, wmat, cout, out_dtype=jnp.bfloat16):
    """PyTorch ConvTranspose2d(k=4, stride=2, padding=1, bias=False), NHWC.
    Input-stationary lowering: one matmul produces every kernel-tap
    contribution (no im2col patches in HBM), then a parity gather assembles
    the 2x-upsampled output."""
    n, h, w, cin = x.shape
    kp, _ = wmat.shape
    x_flat = x.astype(jnp.bfloat16).reshape(n * h * w, cin)
    if kp != cin:
        x_flat = jnp.pad(x_flat, ((0, 0), (0, kp - cin)))
    z = pallas_matmul(x_flat, wmat, out_dtype=out_dtype)
    z = z[:, :16 * cout].reshape(n, h, w, 4, 4, cout)        # [n,i,j,kh,kw,co]
    zp = jnp.pad(z, ((0, 0), (1, 1), (1, 1), (0, 0), (0, 0), (0, 0)))
    parts = []
    for py in (0, 1):
        for px in (0, 1):
            acc = None
            for kh, dy in _ROW_TAPS[py]:
                for kw, dx in _ROW_TAPS[px]:
                    t = zp[:, 1 + dy:1 + dy + h, 1 + dx:1 + dx + w, kh, kw, :]
                    acc = t if acc is None else acc + t
            parts.append(acc)
    out = jnp.stack(parts, axis=0).reshape(2, 2, n, h, w, cout)
    out = jnp.transpose(out, (2, 3, 0, 4, 1, 5)).reshape(n, 2 * h, 2 * w, cout)
    return out


def init_params(key):
    params = {}
    for idx, (cin, cout, _, _) in enumerate(LAYERS):
        key, k = jax.random.split(key)
        params[f"w{idx}"] = 0.02 * jax.random.normal(
            k, (cin, cout, 4, 4), jnp.float32)         # DCGAN-style N(0, 0.02)
        if idx < len(LAYERS) - 1:
            params[f"g{idx}"] = jnp.ones((cout,), jnp.float32)   # BN weight
            params[f"b{idx}"] = jnp.zeros((cout,), jnp.float32)  # BN bias
    return params


def prepare_params(params):
    """Kernel-ready derived parameters, computed ONCE outside the jitted
    forward (no per-call f32 weight reads / transposes / casts)."""
    prep = {}
    for idx, (_, cout, _, _) in enumerate(LAYERS):
        prep[f"w{idx}"] = _prep_wmat(params[f"w{idx}"])
        if idx < len(LAYERS) - 1:
            prep[f"g{idx}"] = params[f"g{idx}"].reshape(1, cout).astype(
                jnp.float32)
            prep[f"b{idx}"] = params[f"b{idx}"].reshape(1, cout).astype(
                jnp.float32)
    return prep


def _bn_relu_nhwc(x, gamma, beta):
    n, h, w, c = x.shape
    return pallas_bn_relu(x.reshape(n * h * w, c), gamma, beta).reshape(
        n, h, w, c)


@jax.jit
def generator_forward(prep, x_nchw):
    n = x_nchw.shape[0]
    cin0, cout0 = LAYERS[0][0], LAYERS[0][1]

    # Layer 0: ConvTranspose2d(100, 512, 4, stride=1, padding=0) on a 1x1
    # spatial input == one matmul against the (kh, kw, cout)-ordered weights.
    x = x_nchw.reshape(n, cin0).astype(jnp.bfloat16)
    w0 = prep["w0"]
    x = jnp.pad(x, ((0, 0), (0, w0.shape[0] - cin0)))
    y = pallas_matmul(x, w0)[:, :16 * cout0].reshape(n, 4, 4, cout0)
    x = _bn_relu_nhwc(y, prep["g0"], prep["b0"])                # bf16

    # Layers 1..3: stride-2 transposed conv + BatchNorm(batch stats) + ReLU.
    for idx in range(1, 4):
        cout = LAYERS[idx][1]
        y = conv_transpose2d_s2(x, prep[f"w{idx}"], cout)
        x = _bn_relu_nhwc(y, prep[f"g{idx}"], prep[f"b{idx}"])

    # Layer 4: stride-2 transposed conv -> Tanh -> NCHW f32 (PyTorch output).
    y = conv_transpose2d_s2(x, prep["w4"], LAYERS[4][1], out_dtype=jnp.float32)
    # Tanh + parity interleave are a tiny fused XLA epilogue (24K elements).
    return jnp.transpose(jnp.tanh(y), (0, 3, 1, 2))


# --------------------- correctness self-check (small) ----------------------

def _ref_deconv_s2(x_nhwc, w):
    """Definitional PyTorch ConvTranspose2d(k=4, s=2, p=1) reference (f32)."""
    n, h, ww, _ = x_nhwc.shape
    cout = w.shape[1]
    contrib = jnp.einsum('nhwi,iokl->nhwklo', x_nhwc, w)
    full = jnp.zeros((n, 2 * h + 2, 2 * ww + 2, cout), jnp.float32)
    for kh in range(4):
        for kw in range(4):
            full = full.at[:, kh:kh + 2 * h:2, kw:kw + 2 * ww:2, :].add(
                contrib[:, :, :, kh, kw, :])
    return full[:, 1:1 + 2 * h, 1:1 + 2 * ww, :]


def _self_check():
    k1, k2, k3, k4 = jax.random.split(jax.random.PRNGKey(1), 4)
    # stride-2 parity/overlap-add path vs the definitional reference
    x = jax.random.normal(k1, (2, 6, 6, 32), jnp.float32)
    w = 0.02 * jax.random.normal(k2, (32, 16, 4, 4), jnp.float32)
    got = conv_transpose2d_s2(x, _prep_wmat(w), 16, out_dtype=jnp.float32)
    err = float(jnp.max(jnp.abs(got - _ref_deconv_s2(x, w))))
    assert err < 3e-2, f"stride-2 deconv mismatch: max err {err}"
    # layer-0 style deconv (1x1 input, stride 1, pad 0) == matmul + reshape
    xs = jax.random.normal(k3, (2, 16), jnp.float32)
    w0 = 0.02 * jax.random.normal(k4, (16, 8, 4, 4), jnp.float32)
    wm = _prep_wmat(w0)
    xs_p = jnp.pad(xs.astype(jnp.bfloat16), ((0, 0), (0, wm.shape[0] - 16)))
    got0 = pallas_matmul(xs_p, wm, out_dtype=jnp.float32)[:, :16 * 8]
    got0 = got0.reshape(2, 4, 4, 8)
    err0 = float(jnp.max(jnp.abs(got0 - jnp.einsum('ni,iokl->nklo', xs, w0))))
    assert err0 < 3e-2, f"1x1 deconv mismatch: max err {err0}"


if __name__ == "__main__":
    _self_check()
    key = jax.random.PRNGKey(0)
    pkey, xkey = jax.random.split(key)
    params = init_params(pkey)
    prep = prepare_params(params)        # bf16 packed weights, built once
    # DCGAN generator input: latent noise (batch=2, 100 channels, 1x1 spatial)
    x = jax.random.normal(xkey, (2, 100, 1, 1), jnp.float32)
    y = generator_forward(prep, x)
    jax.block_until_ready(y)
    assert y.shape == (2, 3, 64, 64), y.shape
    assert bool(jnp.all(jnp.isfinite(y))), "non-finite output"
    print("KERNEL_OK")
</pallas_src>

<mosaic_0001>
module attributes {stable_mosaic.version = 11 : i64} {
  func.func @_mm_kernel(%arg0: i32, %arg1: i32, %arg2: memref<72x128xbf16, #tpu.memory_space<vmem>>, %arg3: memref<128x128xbf16, #tpu.memory_space<vmem>>, %arg4: memref<72x128xf32, #tpu.memory_space<vmem>>) attributes {dimension_semantics = [#tpu.dimension_semantics<parallel>, #tpu.dimension_semantics<parallel>], iteration_bounds = array<i64: 1, 2>, scalar_prefetch = 0 : i64, scratch_operands = 0 : i64, tpu.core_type = #tpu.core_type<tc>, window_params = [{transform_indices = @transform_0, window_bounds = array<i64: 72, 128>}, {transform_indices = @transform_1, window_bounds = array<i64: 128, 128>}, {transform_indices = @transform_2, window_bounds = array<i64: 72, 128>}]} {
    %c0 = arith.constant 0 : index
    %c0_0 = arith.constant 0 : index
    %0 = vector.load %arg2[%c0, %c0_0] : memref<72x128xbf16, #tpu.memory_space<vmem>>, vector<72x128xbf16>
    %c0_1 = arith.constant 0 : index
    %c0_2 = arith.constant 0 : index
    %1 = vector.load %arg3[%c0_1, %c0_2] : memref<128x128xbf16, #tpu.memory_space<vmem>>, vector<128x128xbf16>
    %cst = arith.constant dense<0.000000e+00> : vector<72x128xf32>
    %2 = tpu.matmul %0, %1, %cst {dimension_numbers = #tpu.dot_dimension_numbers<[1], [0], [0], [1], [0, 0, 1, 1], [], []>} : vector<72x128xbf16>, vector<128x128xbf16>, vector<72x128xf32> -> vector<72x128xf32>
    %c0_3 = arith.constant 0 : index
    %c0_4 = arith.constant 0 : index
    %3 = vector.load %arg4[%c0_3, %c0_4] : memref<72x128xf32, #tpu.memory_space<vmem>>, vector<72x128xf32>
    tpu.vector_store %arg4[%c0_3, %c0_4], %2 {strides = array<i32>} : memref<72x128xf32, #tpu.memory_space<vmem>>, vector<72x128xf32>,
    return
  }
  func.func @transform_0(%arg0: i32, %arg1: i32) -> (i32, i32) {
    %c0_i32 = arith.constant 0 : i32
    %c0_i32_0 = arith.constant 0 : i32
    return %arg0, %c0_i32 : i32, i32
  }
  func.func @transform_1(%arg0: i32, %arg1: i32) -> (i32, i32) {
    %c0_i32 = arith.constant 0 : i32
    %c0_i32_0 = arith.constant 0 : i32
    return %c0_i32, %arg1 : i32, i32
  }
  func.func @transform_2(%arg0: i32, %arg1: i32) -> (i32, i32) {
    %c0_i32 = arith.constant 0 : i32
    return %arg0, %arg1 : i32, i32
  }
}

</mosaic_0001>

<llo_original>
// kernel: tpu_custom_call.1
$region0: #{tpu_custom_call.1}
  #allocation0 [shape = 'u32[]', space=smem, size = 0x4, offset = 0x4, fixed_abs, tag = 'smem constant byte address 0x4 - core index']
  #allocation1 [shape = 'u32[72,128]{1,0:T(1,128)}', space=vmem, size = 0x9000, scoped, tag = 'internal scratch']
  %s0 = inlined_call_operand.hbm [shape: bf16[72,128], index: 0, kind: input, shape index: {}]
  %s1 = inlined_call_operand.hbm [shape: bf16[128,256], index: 1, kind: input, shape index: {}]
  %s2 = inlined_call_operand.hbm [shape: f32[72,256], index: 2, kind: output, shape index: {}]
  %s3 = sld [smem:[#allocation0]]
  $region49: #{tpu_custom_call.1} parent=0
    _
  %s5 = ssub.s32 1, %s3
  %s6 = scalar_select 0, %s5, %s3
  $region1: #{tpu_custom_call.1} parent=0
    #allocation2 [shape = 'u8[18432]{0}', space=vmem, size = 0x4800, scoped, tag = 'input window, operand 0, single buffered']
    #allocation3 [shape = 's32[2]{0}', space=sflag, size = 0x8, scoped, tag = 'scoped memory for tpu_custom_call.1']
    #allocation4 [shape = 's32[2]{0}', space=sflag, size = 0x8, scoped, tag = 'scoped memory for tpu_custom_call.1']
    #allocation5 [shape = 'u8[65536]{0}', space=vmem, size = 0x10000, scoped, tag = 'input window, operand 1']
    #allocation6 [shape = 's32[2]{0}', space=sflag, size = 0x8, scoped, tag = 'scoped memory for tpu_custom_call.1']
    #allocation7 [shape = 'u8[73728]{0}', space=vmem, size = 0x12000, scoped, tag = 'output window, operand 0']
    %7 = vsyncpa [#allocation3], 0
    %8 = vsyncpa [#allocation6], 0
    %s9 = scalar_lea.sflag [#allocation6], 1
    %10 = vsyncpa %s9, 0
    %11 = vsyncpa [#allocation4], 0
    %s12 = scalar_lea.sflag [#allocation4], 1
    %13 = vsyncpa %s12, 0
    loop: start=0, step=1, limit=4
    $region2: #{tpu_custom_call.1} parent=1 // loop_pre_header
      _
    $region3: #{tpu_custom_call.1} parent=1 // loop_header
      %s15 = sphi 0, %s19
      %p16 = scmp.ge.s32.totalorder %s15, 4
      %s22 = sphi 0, %s34
      %s23 = sphi 0, %s30
      %s24 = sphi 0, %s22
      %s25 = sphi 0, %s23
      %s26 = sphi 0, %s24
      %s27 = sphi 0, %s25
      %s37 = sphi 0, %s39
      %s40 = sphi 0, %s37
      %s41 = sphi 0, %s40
      %s57 = sphi 0, %s41
      %s63 = sphi 0, %s65
      %s66 = sphi 0, %s63
      %s67 = sphi 0, %s66
      %s83 = sphi 0, %s67
      %s91 = sphi 0, %s93
      %s94 = sphi 0, %s91
      %s95 = sphi 0, %s94
      %s111 = sphi 0, %s95
    $region4: #{tpu_custom_call.1} parent=1 // loop_header_branch
      %18 = sbr.rel (%p16) target = $region8
    $region5: #{tpu_custom_call.1} parent=1 // loop_body
      %s20 = ssub.s32 %s15, 1
      %s21 = ssub.s32 %s15, 2
      %s28 = sadd.s32 1, %s23
      %p29 = scmp.ge.s32.totalorder %s28, 2
      %s30 = scalar_select %p29, 0, %s28
      %s31 = sadd.s32 1, %s22
      %s32 = scalar_select %p29, %s31, %s22
      %p33 = scmp.ge.s32.totalorder %s32, 1
      %s34 = scalar_select %p33, 0, %s32
      %s35 = ssub.s32 %s22, %s34
      %p36 = scmp.eq.s32.totalorder %s35, 0
      %s38 = sadd.s32 %s37, 1
      %s39 = scalar_select %p36, %s37, %s38
      %p42 = pneg %p36
      %p43 = scmp.eq.s32.totalorder %s15, 1
      %p44 = por %p42, %p43
      %p45 = scmp.ne.s32.totalorder %s37, %s40
      %p46 = scmp.eq.s32.totalorder %s15, 0
      %p47 = por %p45, %p46
      %p48 = scmp.ne.s32.totalorder %s37, %s40
      %p49 = scmp.eq.s32.totalorder %s20, 1
      %p50 = por %p48, %p49
      %p51 = scmp.ne.s32.totalorder %s40, %s41
      %p52 = scmp.eq.s32.totalorder %s20, 0
      %p53 = por %p51, %p52
      %p54 = scmp.ne.s32.totalorder %s40, %s41
      %p55 = scmp.eq.s32.totalorder %s21, 1
      %p56 = por %p54, %p55
      %p58 = scmp.ne.s32.totalorder %s41, %s57
      %p59 = scmp.eq.s32.totalorder %s21, 0
      %p60 = por %p58, %p59
      %s61 = ssub.s32 %s23, %s30
      %p62 = scmp.eq.s32.totalorder %s61, 0
      %s64 = sadd.s32 %s63, 1
      %s65 = scalar_select %p62, %s63, %s64
      %p68 = pneg %p62
      %p69 = scmp.eq.s32.totalorder %s15, 1
      %p70 = por %p68, %p69
      %p71 = scmp.ne.s32.totalorder %s63, %s66
      %p72 = scmp.eq.s32.totalorder %s15, 0
      %p73 = por %p71, %p72
      %p74 = scmp.ne.s32.totalorder %s63, %s66
      %p75 = scmp.eq.s32.totalorder %s20, 1
      %p76 = por %p74, %p75
      %p77 = scmp.ne.s32.totalorder %s66, %s67
      %p78 = scmp.eq.s32.totalorder %s20, 0
      %p79 = por %p77, %p78
      %p80 = scmp.ne.s32.totalorder %s66, %s67
      %p81 = scmp.eq.s32.totalorder %s21, 1
      %p82 = por %p80, %p81
      %p84 = scmp.ne.s32.totalorder %s67, %s83
      %p85 = scmp.eq.s32.totalorder %s21, 0
      %p86 = por %p84, %p85
      %s87 = ssub.s32 %s22, %s34
      %s88 = ssub.s32 %s23, %s30
      %s89 = sor.u32 %s87, %s88
      %p90 = scmp.eq.s32.totalorder %s89, 0
      %s92 = sadd.s32 %s91, 1
      %s93 = scalar_select %p90, %s91, %s92
      %p96 = pneg %p90
      %p97 = scmp.eq.s32.totalorder %s15, 1
      %p98 = por %p96, %p97
      %p99 = scmp.ne.s32.totalorder %s91, %s94
      %p100 = scmp.eq.s32.totalorder %s15, 0
      %p101 = por %p99, %p100
      %p102 = scmp.ne.s32.totalorder %s91, %s94
      %p103 = scmp.eq.s32.totalorder %s20, 1
      %p104 = por %p102, %p103
      %p105 = scmp.ne.s32.totalorder %s94, %s95
      %p106 = scmp.eq.s32.totalorder %s20, 0
      %p107 = por %p105, %p106
      %p108 = scmp.ne.s32.totalorder %s94, %s95
      %p109 = scmp.eq.s32.totalorder %s21, 1
      %p110 = por %p108, %p109
      %p112 = scmp.ne.s32.totalorder %s95, %s111
      %p113 = scmp.eq.s32.totalorder %s21, 0
      %p114 = por %p112, %p113
      %p115 = scmp.le.s32.totalorder 1, %s15
      %p116 = scmp.lt.s32.totalorder %s15, 3
      %p117 = pnand %p115, %p116
      %p118 = pneg %p117
      // Predicated region
      $region9: #{tpu_custom_call.1} parent=5 // pred_check
        _
      $region10: #{tpu_custom_call.1} parent=5 // pred_check_branch
        %120 = sbr.rel (%p117) target = $region12
      $region11: #{tpu_custom_call.1} parent=5 // pred_region
        %s121 = ssub.s32 %s15, 1
        // Predicated region
        $region13: #{tpu_custom_call.1} parent=11 // pred_check
          %p122 = pneg %p53
        $region14: #{tpu_custom_call.1} parent=11 // pred_check_branch
          %124 = sbr.rel (%p122) target = $region16
        $region15: #{tpu_custom_call.1} parent=11 // pred_region
          %s125 = smul.u32 9, %s24
          %127 = vsyncadd [#allocation3], 0
          %s128 = smul.addr %s125, 4
          %s129 = scalar_lea.hbm %s0, %s128
          %s130 = sshll.u32 %s129, 4
          %s131 = int_to_ptr.hbm [resolvable:$true] %s130
          %s132 = sshll.u32 [#allocation2], 4
          %s133 = int_to_ptr.vmem [resolvable:$true] %s132
          %138 = dma.hbm_to_vmem [thread:$0]  %s131, 576, %s133, [#allocation3], 64, 64, 4
        $region16: #{tpu_custom_call.1} parent=11 // pred_fallthru
          _
      $region12: #{tpu_custom_call.1} parent=5 // pred_fallthru
        _
      %p139 = scmp.lt.s32.totalorder %s15, 2
      // Predicated region
      $region17: #{tpu_custom_call.1} parent=5 // pred_check
        %p140 = pneg %p139
      $region18: #{tpu_custom_call.1} parent=5 // pred_check_branch
        %142 = sbr.rel (%p140) target = $region20
      $region19: #{tpu_custom_call.1} parent=5 // pred_region
        // Predicated region
        $region21: #{tpu_custom_call.1} parent=19 // pred_check
          %p143 = pneg %p73
        $region22: #{tpu_custom_call.1} parent=19 // pred_check_branch
          %145 = sbr.rel (%p143) target = $region24
        $region23: #{tpu_custom_call.1} parent=19 // pred_region
          %s146 = sand.u32 %s63, 1
          %s147 = scalar_lea.sflag [#allocation6], %s146
          %s148 = sand.u32 %s63, 1
          %s149 = smul.addr %s148, 64
          %s150 = scalar_lea.vmem [#allocation5], %s149
          %152 = vsyncadd %s147, 0
          %s153 = smul.addr %s23, 4
          %s154 = scalar_lea.hbm %s1, %s153
          %s155 = sshll.u32 %s154, 4
          %s156 = int_to_ptr.hbm [resolvable:$true] %s155
          %s157 = sshll.u32 %s150, 4
          %s158 = int_to_ptr.vmem [resolvable:$true] %s157
          %163 = dma.hbm_to_vmem [thread:$0]  %s156, 1024, %s158, %s147, 128, 64, 4
        $region24: #{tpu_custom_call.1} parent=19 // pred_fallthru
          _
      $region20: #{tpu_custom_call.1} parent=5 // pred_fallthru
        _
      %p164 = scmp.le.s32.totalorder 1, %s15
      %p165 = scmp.lt.s32.totalorder %s15, 3
      %p166 = pnand %p164, %p165
      %p167 = pneg %p166
      // Predicated region
      $region25: #{tpu_custom_call.1} parent=5 // pred_check
        _
      $region26: #{tpu_custom_call.1} parent=5 // pred_check_branch
        %169 = sbr.rel (%p166) target = $region28
      $region27: #{tpu_custom_call.1} parent=5 // pred_region
        %s170 = ssub.s32 %s15, 1
        // Predicated region
        $region29: #{tpu_custom_call.1} parent=27 // pred_check
          %p171 = pneg %p53
        $region30: #{tpu_custom_call.1} parent=27 // pred_check_branch
          %173 = sbr.rel (%p171) target = $region32
        $region31: #{tpu_custom_call.1} parent=27 // pred_region
          %175 = dma.done [#allocation3], 576
        $region32: #{tpu_custom_call.1} parent=27 // pred_fallthru
          _
        %s176 = sand.u32 %s66, 1
        %s177 = scalar_lea.sflag [#allocation6], %s176
        %s178 = sand.u32 %s66, 1
        %s179 = smul.addr %s178, 64
        %s180 = scalar_lea.vmem [#allocation5], %s179
        // Predicated region
        $region33: #{tpu_custom_call.1} parent=27 // pred_check
          %p181 = pneg %p79
        $region34: #{tpu_custom_call.1} parent=27 // pred_check_branch
          %183 = sbr.rel (%p181) target = $region36
        $region35: #{tpu_custom_call.1} parent=27 // pred_region
          %185 = dma.done %s177, 1024
        $region36: #{tpu_custom_call.1} parent=27 // pred_fallthru
          _
        %p186 = pneg %p53
        %p187 = pneg %p50
        %s188 = sand.u32 %s66, 1
        %s189 = scalar_lea.sflag [#allocation6], %s188
        %s190 = sand.u32 %s66, 1
        %s191 = smul.addr %s190, 64
        %s192 = scalar_lea.vmem [#allocation5], %s191
        %p193 = pneg %p79
        %p194 = pneg %p76
        %p195 = pneg %p107
        %p196 = pneg %p104
        %s197 = sand.u32 %s94, 1
        %s198 = scalar_lea.sflag [#allocation4], %s197
        %s199 = sand.u32 %s94, 1
        %s200 = smul.addr %s199, 72
        %s201 = scalar_lea.vmem [#allocation7], %s200
        %s202 = smul.u32 9, %s24
        %s203 = smul.u32 9, %s24
        %v204 = vld [vmem:[#allocation2] sm:$0xf]
        %v205 = vld [vmem:[#allocation2 + $0x4] sm:$0xf]
        %v206 = vld [vmem:[#allocation2 + $0x8] sm:$0xf]
        %v207 = vld [vmem:[#allocation2 + $0xc] sm:$0xf]
        %v208 = vld [vmem:[#allocation2 + $0x10] sm:$0xf]
        %v209 = vld [vmem:[#allocation2 + $0x14] sm:$0xf]
        %v210 = vld [vmem:[#allocation2 + $0x18] sm:$0xf]
        %v211 = vld [vmem:[#allocation2 + $0x1c] sm:$0xf]
        %v212 = vld [vmem:[#allocation2 + $0x20] sm:$0xf]
        %v213 = vld [vmem:[%s180] sm:$0xf]
        %v214 = vld [vmem:[%s180 + $0x4] sm:$0xf]
        %v215 = vld [vmem:[%s180 + $0x8] sm:$0xf]
        %v216 = vld [vmem:[%s180 + $0xc] sm:$0xf]
        %v217 = vld [vmem:[%s180 + $0x10] sm:$0xf]
        %v218 = vld [vmem:[%s180 + $0x14] sm:$0xf]
        %v219 = vld [vmem:[%s180 + $0x18] sm:$0xf]
        %v220 = vld [vmem:[%s180 + $0x1c] sm:$0xf]
        %v221 = vld [vmem:[%s180 + $0x20] sm:$0xf]
        %v222 = vld [vmem:[%s180 + $0x24] sm:$0xf]
        %v223 = vld [vmem:[%s180 + $0x28] sm:$0xf]
        %v224 = vld [vmem:[%s180 + $0x2c] sm:$0xf]
        %v225 = vld [vmem:[%s180 + $0x30] sm:$0xf]
        %v226 = vld [vmem:[%s180 + $0x34] sm:$0xf]
        %v227 = vld [vmem:[%s180 + $0x38] sm:$0xf]
        %v228 = vld [vmem:[%s180 + $0x3c] sm:$0xf]
        %v238 = vunpack.c.l.b16 %v204
        %v239 = vunpack.c.l.b16 %v205
        %v240 = vunpack.c.l.b16 %v206
        %v241 = vunpack.c.l.b16 %v207
        %v242 = vunpack.c.l.b16 %v208
        %v243 = vunpack.c.l.b16 %v209
        %v244 = vunpack.c.l.b16 %v210
        %v245 = vunpack.c.l.b16 %v211
        %v246 = vunpack.c.l.b16 %v212
        %v247 = vpack.c.b16 %v239, %v238
        %v248 = vpack.c.b16 %v241, %v240
        %v249 = vpack.c.b16 %v243, %v242
        %v250 = vpack.c.b16 %v245, %v244
        %v251 = vpack.c.b16 %v246, %v246
        %v273 = vunpack.c.l.b16 %v213
        %v274 = vunpack.c.l.b16 %v214
        %v275 = vunpack.c.l.b16 %v215
        %v276 = vunpack.c.l.b16 %v216
        %v277 = vunpack.c.l.b16 %v217
        %v278 = vunpack.c.l.b16 %v218
        %v279 = vunpack.c.l.b16 %v219
        %v280 = vunpack.c.l.b16 %v220
        %v281 = vunpack.c.l.b16 %v221
        %v282 = vunpack.c.l.b16 %v222
        %v283 = vunpack.c.l.b16 %v223
        %v284 = vunpack.c.l.b16 %v224
        %v285 = vunpack.c.l.b16 %v225
        %v286 = vunpack.c.l.b16 %v226
        %v287 = vunpack.c.l.b16 %v227
        %v288 = vunpack.c.l.b16 %v228
        %v289 = vpack.c.b16 %v274, %v273
        %v290 = vpack.c.b16 %v276, %v275
        %v291 = vpack.c.b16 %v278, %v277
        %v292 = vpack.c.b16 %v280, %v279
        %v293 = vpack.c.b16 %v282, %v281
        %v294 = vpack.c.b16 %v284, %v283
        %v295 = vpack.c.b16 %v286, %v285
        %v296 = vpack.c.b16 %v288, %v287
        %305 = vmatpush.bf16.msra.mxu0 %v296
        %306 = vmatpush.bf16.msra.mxu0 %v295
        %307 = vmatpush.bf16.msra.mxu0 %v294
        %308 = vmatpush.bf16.msra.mxu0 %v293
        %309 = vmatpush.bf16.msra.mxu0 %v292
        %310 = vmatpush.bf16.msra.mxu0 %v291
        %311 = vmatpush.bf16.msra.mxu0 %v290
        %312 = vmatpush.bf16.msra.mxu0 %v289
        %313 = vmatmul.bf16.gmra.mxu0 %v247
        %v314 = vpop.f32.mrf.mxu0
        %v315 = vadd.f32 0.0, %v314
        %v316 = vpop.f32.mrf.mxu0
        %v317 = vadd.f32 0.0, %v316
        %318 = vmatmul.bf16.gmra.mxu0 %v248
        %v319 = vpop.f32.mrf.mxu0
        %v320 = vadd.f32 0.0, %v319
        %v321 = vpop.f32.mrf.mxu0
        %v322 = vadd.f32 0.0, %v321
        %323 = vmatmul.bf16.gmra.mxu0 %v249
        %v324 = vpop.f32.mrf.mxu0
        %v325 = vadd.f32 0.0, %v324
        %v326 = vpop.f32.mrf.mxu0
        %v327 = vadd.f32 0.0, %v326
        %328 = vmatmul.bf16.gmra.mxu0 %v250
        %v329 = vpop.f32.mrf.mxu0
        %v330 = vadd.f32 0.0, %v329
        %v331 = vpop.f32.mrf.mxu0
        %v332 = vadd.f32 0.0, %v331
        %333 = vmatmul.bf16.gmra.mxu0 %v251
        %v334 = vpop.f32.mrf.mxu0
        %v335 = vadd.f32 0.0, %v334
        %v336 = vpop.f32.mrf.mxu0
        %337 = vdwg.mxu0
        %338 = vst [vmem:[%s201] sm:$0xff] %v315
        %339 = vst [vmem:[%s201 + $0x8] sm:$0xff] %v317
        %340 = vst [vmem:[%s201 + $0x10] sm:$0xff] %v320
        %341 = vst [vmem:[%s201 + $0x18] sm:$0xff] %v322
        %342 = vst [vmem:[%s201 + $0x20] sm:$0xff] %v325
        %343 = vst [vmem:[%s201 + $0x28] sm:$0xff] %v327
        %344 = vst [vmem:[%s201 + $0x30] sm:$0xff] %v330
        %345 = vst [vmem:[%s201 + $0x38] sm:$0xff] %v332
        %346 = vst [vmem:[%s201 + $0x40] sm:$0xff] %v335
        %s347 = sand.u32 %s94, 1
        %s348 = scalar_lea.sflag [#allocation4], %s347
        %s349 = sand.u32 %s94, 1
        %s350 = smul.addr %s349, 72
        %s351 = scalar_lea.vmem [#allocation7], %s350
        // Predicated region
        $region37: #{tpu_custom_call.1} parent=27 // pred_check
          %p352 = pneg %p104
        $region38: #{tpu_custom_call.1} parent=27 // pred_check_branch
          %354 = sbr.rel (%p352) target = $region40
        $region39: #{tpu_custom_call.1} parent=27 // pred_region
          %s355 = smul.u32 9, %s24
          %357 = vsyncadd %s348, 0
          %s358 = smul.addr %s355, 2
          %s359 = sadd.s32 %s25, %s358
          %s360 = smul.addr %s359, 8
          %s361 = scalar_lea.hbm %s2, %s360
          %s362 = sshll.u32 %s351, 4
          %s363 = int_to_ptr.vmem [resolvable:$true] %s362
          %s364 = sshll.u32 %s361, 4
          %s365 = int_to_ptr.hbm [resolvable:$true] %s364
          %370 = dma.vmem_to_hbm [thread:$0]  %s363, 1152, %s365, %s348, 128, 256, 8
        $region40: #{tpu_custom_call.1} parent=27 // pred_fallthru
          _
      $region28: #{tpu_custom_call.1} parent=5 // pred_fallthru
        _
      %p371 = scmp.le.s32.totalorder 2, %s15
      // Predicated region
      $region41: #{tpu_custom_call.1} parent=5 // pred_check
        %p372 = pneg %p371
      $region42: #{tpu_custom_call.1} parent=5 // pred_check_branch
        %374 = sbr.rel (%p372) target = $region44
      $region43: #{tpu_custom_call.1} parent=5 // pred_region
        %s375 = ssub.s32 %s15, 2
        // Predicated region
        $region45: #{tpu_custom_call.1} parent=43 // pred_check
          %p376 = pneg %p110
        $region46: #{tpu_custom_call.1} parent=43 // pred_check_branch
          %378 = sbr.rel (%p376) target = $region48
        $region47: #{tpu_custom_call.1} parent=43 // pred_region
          %s379 = sand.u32 %s95, 1
          %s380 = scalar_lea.sflag [#allocation4], %s379
          %s381 = sand.u32 %s95, 1
          %s382 = smul.addr %s381, 72
          %s383 = scalar_lea.vmem [#allocation7], %s382
          %385 = dma.done %s380, 1152
        $region48: #{tpu_custom_call.1} parent=43 // pred_fallthru
          _
      $region44: #{tpu_custom_call.1} parent=5 // pred_fallthru
        _
    $region6: #{tpu_custom_call.1} parent=1 // loop_footer
      %s19 = sadd.s32 1, %s15
    $region7: #{tpu_custom_call.1} parent=1 // loop_footer_branch
      %14 = sbr.rel target = $region3
    $region8: #{tpu_custom_call.1} parent=1 // loop_exit
      _
    %386 = vsyncpa [#allocation3], 1
    %s387 = scalar_lea.sflag [#allocation3], 1
    %388 = vsyncpa %s387, 1
    %389 = vsyncpa [#allocation6], 1
    %s390 = scalar_lea.sflag [#allocation6], 1
    %391 = vsyncpa %s390, 1
    %392 = vsyncpa [#allocation4], 1
    %s393 = scalar_lea.sflag [#allocation4], 1
    %394 = vsyncpa %s393, 1

</llo_original>
